<compile_context>
chip_gen: v5e
topology: v5e:2x2
jax: 0.10.0
libtpu: 0.0.40
codegen_flags: <defaults>
</compile_context>

<pallas_src>
import functools

import jax
import jax.numpy as jnp
from jax.experimental import pallas as pl
from jax.experimental.pallas import tpu as pltpu


def _round_up(n, m):
    return ((n + m - 1) // m) * m


def _device_defaults():
    """Per-TPU-generation tile defaults and VMEM caps."""
    try:
        kind = jax.devices()[0].device_kind.lower()
    except Exception:
        kind = ""
    if "v7" in kind:
        # 64 MiB VMEM per TensorCore: smaller reduction tile, big token tile,
        # and shard the token axis across the 2 TensorCores.
        return {"tm": 512, "ti": 256, "core_parallel": True, "vmem_cap": 64 << 20}
    # v5e / v6e: 128 MiB VMEM; tm=512 keeps the kernel above the HBM roofline
    # for weight streaming. (On v5e, if steady-state DMA is exposed, a 3-deep
    # weight pipe via pipeline_mode=pl.Buffered(3) is the next knob.)
    return {"tm": 512, "ti": 512, "core_parallel": False, "vmem_cap": 128 << 20}


def _mlp_kernel(x_ref, wgu_ref, wd_ref, o_ref, acc_ref):
    # x_ref:   (tm, H)     token tile (bf16)
    # wgu_ref: (H, 2*ti)   fused [gate | up] weight slab (one MXU matmul)
    # wd_ref:  (ti, H)     down_proj weight slab
    # o_ref:   (tm, H)     output tile
    # acc_ref: (tm, H)     f32 accumulator, resident across the I (k) axis
    k = pl.program_id(1)

    @pl.when(k == 0)
    def _():
        acc_ref[...] = jnp.zeros_like(acc_ref)

    ti = wd_ref.shape[0]
    # Single fused matmul for gate and up (shared LHS), f32 accumulation.
    gu = jnp.dot(x_ref[...], wgu_ref[...], preferred_element_type=jnp.float32)
    g = gu[:, :ti]   # split on a 128-lane boundary -> no materialized copies
    u = gu[:, ti:]
    # SiLU(g) * u in f32; sigmoid lowers to the EUP (free slot alongside MXU).
    h = (g * jax.nn.sigmoid(g)) * u
    # Single narrow-dtype cast of h right before the down_proj matmul.
    acc_ref[...] += jnp.dot(
        h.astype(wd_ref.dtype), wd_ref[...], preferred_element_type=jnp.float32
    )

    @pl.when(k == pl.num_programs(1) - 1)
    def _():
        o_ref[...] = acc_ref[...].astype(o_ref.dtype)


def prepare_llama_mlp_weights(wg, wu, wd, *, ti=None, dtype=jnp.bfloat16):
    """One-time weight prep (not per forward call).

    Inputs are PyTorch nn.Linear layouts:
      wg, wu: (I, H)  gate/up proj weights (out_features, in_features)
      wd:     (H, I)  down proj weight

    Returns:
      wgu_slabs: (nblk, H, 2*ti)  slab-contiguous [gate | up] weights, I padded
      wd_t:      (Ip, H)          down proj in (in, out) layout, I padded
    """
    wg = jnp.asarray(wg)
    wu = jnp.asarray(wu)
    wd = jnp.asarray(wd)
    I, H = wg.shape
    assert wu.shape == (I, H) and wd.shape == (H, I)

    if ti is None:
        ti = _device_defaults()["ti"]
    ti = min(ti, _round_up(I, 128))          # lane-aligned reduction tile
    Ip = _round_up(I, ti)                    # zero-pad I instead of full-I slabs
    pad_i = Ip - I

    wg_t = wg.T.astype(dtype)                # (H, I)
    wu_t = wu.T.astype(dtype)
    wd_t = wd.T.astype(dtype)                # (I, H)
    if pad_i:
        wg_t = jnp.pad(wg_t, ((0, 0), (0, pad_i)))
        wu_t = jnp.pad(wu_t, ((0, 0), (0, pad_i)))
        wd_t = jnp.pad(wd_t, ((0, pad_i), (0, 0)))

    nblk = Ip // ti
    # (H, Ip) -> (nblk, H, ti), then concat gate|up along lanes -> (nblk, H, 2*ti).
    # Each grid step's weight DMA is now one fully contiguous slab.
    wg_s = wg_t.reshape(H, nblk, ti).transpose(1, 0, 2)
    wu_s = wu_t.reshape(H, nblk, ti).transpose(1, 0, 2)
    wgu_slabs = jnp.concatenate([wg_s, wu_s], axis=-1)
    return wgu_slabs, wd_t


@functools.partial(jax.jit, static_argnames=("tm",))
def llama_mlp(x, wgu_slabs, wd_t, *, tm=None):
    """x: (B, S, H). wgu_slabs: (nblk, H, 2*ti); wd_t: (Ip, H) from prep."""
    B, S, H = x.shape
    nblk, Hw, two_ti = wgu_slabs.shape
    ti = two_ti // 2
    Ip = nblk * ti
    assert Hw == H and wd_t.shape == (Ip, H)

    cfg = _device_defaults()
    if tm is None:
        tm = cfg["tm"]

    compute_dtype = wgu_slabs.dtype
    M = B * S
    x2d = x.reshape(M, H).astype(compute_dtype)

    # Token tile: multiple of 8 sublanes, shrink for tiny M, pad M up (padded
    # rows are zero and sliced off after the call).
    tm = min(tm, _round_up(M, 8))
    Mp = _round_up(M, tm)
    if Mp != M:
        x2d = jnp.pad(x2d, ((0, Mp - M), (0, 0)))
    num_m_tiles = Mp // tm

    # VMEM budget: double-buffered x / fused-weight / down-weight / out tiles,
    # the f32 accumulator scratch, PLUS compiler-internal scratch for the
    # (tm, 2*ti) f32 intermediates (gu, silu, h) and the bf16 cast of h.
    w_item = jnp.dtype(compute_dtype).itemsize
    out_item = jnp.dtype(x.dtype).itemsize
    vmem_bytes = (
        2 * tm * H * w_item            # x tile (double buffered)
        + 2 * H * (2 * ti) * w_item    # fused gate|up slab
        + 2 * ti * H * w_item          # down_proj slab
        + 2 * tm * H * out_item        # output tile
        + tm * H * 4                   # f32 accumulator scratch
        + 3 * tm * (2 * ti) * 4        # f32 intermediates (gu, silu(g), h)
        + tm * ti * w_item             # narrow cast of h
    )
    vmem_limit = min(cfg["vmem_cap"], max(32 << 20, int(vmem_bytes) + (6 << 20)))

    # Megacore / dual-TensorCore: shard the token axis across cores on v7x
    # (only if there are at least 2 M tiles to hand out).
    if cfg["core_parallel"] and num_m_tiles >= 2:
        dim_sems = (pltpu.CORE_PARALLEL, pltpu.ARBITRARY)
    else:
        dim_sems = ("parallel", "arbitrary")

    # Advisory cost estimate for XLA's scheduler around the custom call.
    flops = 6 * M * H * Ip + 4 * M * Ip
    bytes_accessed = (
        M * H * (w_item + out_item)                       # activations in/out
        + num_m_tiles * (3 * H * Ip) * w_item             # weights per M tile
    )
    cost = pl.CostEstimate(
        flops=flops, transcendentals=M * Ip, bytes_accessed=bytes_accessed
    )

    out2d = pl.pallas_call(
        _mlp_kernel,
        out_shape=jax.ShapeDtypeStruct((Mp, H), x.dtype),
        grid_spec=pltpu.PrefetchScalarGridSpec(
            num_scalar_prefetch=0,
            grid=(num_m_tiles, nblk),
            in_specs=[
                pl.BlockSpec((tm, H), lambda i, k: (i, 0)),            # x tile
                pl.BlockSpec((None, H, 2 * ti), lambda i, k: (k, 0, 0)),  # gate|up slab
                pl.BlockSpec((ti, H), lambda i, k: (k, 0)),            # down slab
            ],
            out_specs=pl.BlockSpec((tm, H), lambda i, k: (i, 0)),
            scratch_shapes=[pltpu.VMEM((tm, H), jnp.float32)],
        ),
        compiler_params=pltpu.CompilerParams(
            dimension_semantics=dim_sems,
            vmem_limit_bytes=vmem_limit,
        ),
        cost_estimate=cost,
    )(x2d, wgu_slabs, wd_t)

    return out2d[:M].reshape(B, S, H)


def llama_mlp_ref(x, wg, wu, wd, dtype=jnp.bfloat16):
    """Reference on the same (narrow-dtype-quantized) operands, f32 math."""
    xf = x.astype(dtype).astype(jnp.float32)
    g = xf @ wg.T.astype(dtype).astype(jnp.float32)
    u = xf @ wu.T.astype(dtype).astype(jnp.float32)
    h = (jax.nn.silu(g) * u).astype(dtype).astype(jnp.float32)
    return (h @ wd.T.astype(dtype).astype(jnp.float32)).astype(x.dtype)


if __name__ == "__main__":
    # Small config consistent with LlamaMLP (hidden -> intermediate -> hidden)
    batch, seq = 2, 8
    hidden_size = 128
    intermediate_size = 256

    key = jax.random.PRNGKey(0)
    kx, kg, ku, kd = jax.random.split(key, 4)

    x = jax.random.normal(kx, (batch, seq, hidden_size), dtype=jnp.float32)
    # "Linear" weights in PyTorch layout (out_features, in_features)
    scale = 0.02
    wg = scale * jax.random.normal(kg, (intermediate_size, hidden_size), dtype=jnp.float32)
    wu = scale * jax.random.normal(ku, (intermediate_size, hidden_size), dtype=jnp.float32)
    wd = scale * jax.random.normal(kd, (hidden_size, intermediate_size), dtype=jnp.float32)

    # One-time weight prep (transpose + pad + slab layout + bf16 cast).
    wgu_slabs, wd_t = prepare_llama_mlp_weights(wg, wu, wd, dtype=jnp.bfloat16)

    out = llama_mlp(x, wgu_slabs, wd_t)
    out = jax.block_until_ready(out)

    ref = llama_mlp_ref(x, wg, wu, wd, dtype=jnp.bfloat16)
    assert out.shape == (batch, seq, hidden_size)
    assert jnp.allclose(out, ref, atol=2e-3, rtol=2e-2), "mismatch vs reference"

    print("KERNEL_OK")
</pallas_src>

<mosaic_0001>
module attributes {stable_mosaic.version = 11 : i64} {
  func.func @_mlp_kernel(%arg0: i32, %arg1: i32, %arg2: memref<16x128xbf16, #tpu.memory_space<vmem>>, %arg3: memref<1x128x512xbf16, #tpu.memory_space<vmem>>, %arg4: memref<256x128xbf16, #tpu.memory_space<vmem>>, %arg5: memref<16x128xf32, #tpu.memory_space<vmem>>, %arg6: memref<16x128xf32, #tpu.memory_space<vmem>>) attributes {dimension_semantics = [#tpu.dimension_semantics<parallel>, #tpu.dimension_semantics<arbitrary>], iteration_bounds = array<i64: 1, 1>, scalar_prefetch = 0 : i64, scratch_operands = 1 : i64, tpu.core_type = #tpu.core_type<tc>, window_params = [{transform_indices = @transform_0, window_bounds = array<i64: 16, 128>}, {transform_indices = @transform_1, window_bounds = array<i64: 1, 128, 512>}, {transform_indices = @transform_2, window_bounds = array<i64: 256, 128>}, {transform_indices = @transform_3, window_bounds = array<i64: 16, 128>}]} {
    %c0_i32 = arith.constant 0 : i32
    %0 = arith.cmpi eq, %arg1, %c0_i32 : i32
    %1 = arith.extui %0 : i1 to i32
    %c0_i32_0 = arith.constant 0 : i32
    %2 = arith.cmpi ne, %1, %c0_i32_0 : i32
    scf.if %2 {
      %cst_15 = arith.constant 0.000000e+00 : f32
      %25 = vector.broadcast %cst_15 : f32 to vector<16x128xf32>
      %c0_16 = arith.constant 0 : index
      %c0_17 = arith.constant 0 : index
      %26 = vector.load %arg6[%c0_16, %c0_17] : memref<16x128xf32, #tpu.memory_space<vmem>>, vector<16x128xf32>
      tpu.vector_store %arg6[%c0_16, %c0_17], %25 {strides = array<i32>} : memref<16x128xf32, #tpu.memory_space<vmem>>, vector<16x128xf32>,
    } else {
    }
    %c0 = arith.constant 0 : index
    %c0_1 = arith.constant 0 : index
    %3 = vector.load %arg2[%c0, %c0_1] : memref<16x128xbf16, #tpu.memory_space<vmem>>, vector<16x128xbf16>
    %c0_2 = arith.constant 0 : index
    %c0_3 = arith.constant 0 : index
    %c0_4 = arith.constant 0 : index
    %4 = vector.load %arg3[%c0_2, %c0_3, %c0_4] : memref<1x128x512xbf16, #tpu.memory_space<vmem>>, vector<1x128x512xbf16>
    %5 = vector.shape_cast %4 : vector<1x128x512xbf16> to vector<128x512xbf16>
    %cst = arith.constant dense<0.000000e+00> : vector<16x512xf32>
    %6 = tpu.matmul %3, %5, %cst {dimension_numbers = #tpu.dot_dimension_numbers<[1], [0], [0], [1], [0, 0, 1, 1], [], []>} : vector<16x128xbf16>, vector<128x512xbf16>, vector<16x512xf32> -> vector<16x512xf32>
    %7 = vector.extract_strided_slice %6 {offsets = [0, 0], sizes = [16, 256], strides = [1, 1]} : vector<16x512xf32> to vector<16x256xf32>
    %8 = vector.extract_strided_slice %6 {offsets = [0, 256], sizes = [16, 256], strides = [1, 1]} : vector<16x512xf32> to vector<16x256xf32>
    %9 = arith.negf %7 : vector<16x256xf32>
    %10 = math.exp %9 : vector<16x256xf32>
    %cst_5 = arith.constant 1.000000e+00 : f32
    %11 = vector.broadcast %cst_5 : f32 to vector<16x256xf32>
    %12 = arith.addf %11, %10 : vector<16x256xf32>
    %13 = arith.divf %11, %12 : vector<16x256xf32>
    %14 = arith.mulf %7, %13 : vector<16x256xf32>
    %15 = arith.mulf %14, %8 : vector<16x256xf32>
    %c0_6 = arith.constant 0 : index
    %c0_7 = arith.constant 0 : index
    %16 = vector.load %arg6[%c0_6, %c0_7] : memref<16x128xf32, #tpu.memory_space<vmem>>, vector<16x128xf32>
    %17 = arith.truncf %15 : vector<16x256xf32> to vector<16x256xbf16>
    %c0_8 = arith.constant 0 : index
    %c0_9 = arith.constant 0 : index
    %18 = vector.load %arg4[%c0_8, %c0_9] : memref<256x128xbf16, #tpu.memory_space<vmem>>, vector<256x128xbf16>
    %cst_10 = arith.constant dense<0.000000e+00> : vector<16x128xf32>
    %19 = tpu.matmul %17, %18, %cst_10 {dimension_numbers = #tpu.dot_dimension_numbers<[1], [0], [0], [1], [0, 0, 1, 1], [], []>} : vector<16x256xbf16>, vector<256x128xbf16>, vector<16x128xf32> -> vector<16x128xf32>
    %20 = arith.addf %16, %19 : vector<16x128xf32>
    %c0_11 = arith.constant 0 : index
    %c0_12 = arith.constant 0 : index
    %21 = vector.load %arg6[%c0_11, %c0_12] : memref<16x128xf32, #tpu.memory_space<vmem>>, vector<16x128xf32>
    tpu.vector_store %arg6[%c0_11, %c0_12], %20 {strides = array<i32>} : memref<16x128xf32, #tpu.memory_space<vmem>>, vector<16x128xf32>,
    %c0_i32_13 = arith.constant 0 : i32
    %22 = arith.cmpi eq, %arg1, %c0_i32_13 : i32
    %23 = arith.extui %22 : i1 to i32
    %c0_i32_14 = arith.constant 0 : i32
    %24 = arith.cmpi ne, %23, %c0_i32_14 : i32
    scf.if %24 {
      %c0_15 = arith.constant 0 : index
      %c0_16 = arith.constant 0 : index
      %25 = vector.load %arg6[%c0_15, %c0_16] : memref<16x128xf32, #tpu.memory_space<vmem>>, vector<16x128xf32>
      %c0_17 = arith.constant 0 : index
      %c0_18 = arith.constant 0 : index
      %26 = vector.load %arg5[%c0_17, %c0_18] : memref<16x128xf32, #tpu.memory_space<vmem>>, vector<16x128xf32>
      tpu.vector_store %arg5[%c0_17, %c0_18], %25 {strides = array<i32>} : memref<16x128xf32, #tpu.memory_space<vmem>>, vector<16x128xf32>,
    } else {
    }
    return
  }
  func.func @transform_0(%arg0: i32, %arg1: i32) -> (i32, i32) {
    %c0_i32 = arith.constant 0 : i32
    %c0_i32_0 = arith.constant 0 : i32
    return %arg0, %c0_i32 : i32, i32
  }
  func.func @transform_1(%arg0: i32, %arg1: i32) -> (i32, i32, i32) {
    %c0_i32 = arith.constant 0 : i32
    %c0_i32_0 = arith.constant 0 : i32
    %c0_i32_1 = arith.constant 0 : i32
    return %arg1, %c0_i32, %c0_i32_0 : i32, i32, i32
  }
  func.func @transform_2(%arg0: i32, %arg1: i32) -> (i32, i32) {
    %c0_i32 = arith.constant 0 : i32
    %c0_i32_0 = arith.constant 0 : i32
    return %arg1, %c0_i32 : i32, i32
  }
  func.func @transform_3(%arg0: i32, %arg1: i32) -> (i32, i32) {
    %c0_i32 = arith.constant 0 : i32
    %c0_i32_0 = arith.constant 0 : i32
    return %arg0, %c0_i32 : i32, i32
  }
}

</mosaic_0001>

<llo_original>
// kernel: llama_mlp.1
$region0: #{llama_mlp.1}
  #allocation0 [shape = 'u32[]', space=smem, size = 0x4, offset = 0x4, fixed_abs, tag = 'smem constant byte address 0x4 - core index']
  #allocation1 [shape = 'u32[72,128]{1,0:T(1,128)}', space=vmem, size = 0x9000, scoped, tag = 'internal scratch']
  #allocation2 [shape = 'f32[16,128]{1,0:T(8,128)}', space=vmem, size = 0x2000, scoped, tag = 'scratch operand']
  %s0 = inlined_call_operand.vmem [shape: bf16[16,128], index: 0, kind: input, shape index: {}]
  %s1 = inlined_call_operand.hbm [shape: bf16[1,128,512], index: 1, kind: input, shape index: {}]
  %s2 = inlined_call_operand.hbm [shape: bf16[256,128], index: 2, kind: input, shape index: {}]
  %s3 = inlined_call_operand.hbm [shape: f32[16,128], index: 3, kind: output, shape index: {}]
  %s4 = sld [smem:[#allocation0]]
  $region38: #{llama_mlp.1} parent=0
    _
  %s6 = ssub.s32 1, %s4
  %s7 = scalar_select 0, %s6, %s4
  $region1: #{llama_mlp.1} parent=0
    #allocation3 [shape = 'u8[131072]{0}', space=vmem, size = 0x20000, scoped, tag = 'input window, operand 1, single buffered']
    #allocation4 [shape = 's32[1]{0}', space=sflag, size = 0x4, scoped, tag = 'scoped memory for llama_mlp.1']
    #allocation5 [shape = 's32[1]{0}', space=sflag, size = 0x4, scoped, tag = 'scoped memory for llama_mlp.1']
    #allocation6 [shape = 'u8[65536]{0}', space=vmem, size = 0x10000, scoped, tag = 'input window, operand 2, single buffered']
    #allocation7 [shape = 's32[1]{0}', space=sflag, size = 0x4, scoped, tag = 'scoped memory for llama_mlp.1']
    #allocation8 [shape = 'u8[8192]{0}', space=vmem, size = 0x2000, scoped, tag = 'output window, operand 0, single buffered']
    %8 = vsyncpa [#allocation4], 0
    %9 = vsyncpa [#allocation7], 0
    %10 = vsyncpa [#allocation5], 0
    // Predicated region
    $region2: #{llama_mlp.1} parent=1 // pred_check
      _
    $region3: #{llama_mlp.1} parent=1 // pred_check_branch
      %12 = sbr.rel (0) target = $region5
    $region4: #{llama_mlp.1} parent=1 // pred_region
      _
    $region5: #{llama_mlp.1} parent=1 // pred_fallthru
      _
    // Predicated region
    $region6: #{llama_mlp.1} parent=1 // pred_check
      _
    $region7: #{llama_mlp.1} parent=1 // pred_check_branch
      %14 = sbr.rel (0) target = $region9
    $region8: #{llama_mlp.1} parent=1 // pred_region
      %16 = vsyncadd [#allocation4], 0
      %s17 = sshll.u32 %s1, 4
      %s18 = int_to_ptr.hbm [resolvable:$true] %s17
      %s19 = sshll.u32 [#allocation3], 4
      %s20 = int_to_ptr.vmem [resolvable:$true] %s19
      %25 = dma.hbm_to_vmem [thread:$0]  %s18, 4096, %s20, [#allocation4], 256, 256, 16
    $region9: #{llama_mlp.1} parent=1 // pred_fallthru
      _
    // Predicated region
    $region10: #{llama_mlp.1} parent=1 // pred_check
      _
    $region11: #{llama_mlp.1} parent=1 // pred_check_branch
      %27 = sbr.rel (0) target = $region13
    $region12: #{llama_mlp.1} parent=1 // pred_region
      %29 = vsyncadd [#allocation7], 0
      %s30 = sshll.u32 %s2, 4
      %s31 = int_to_ptr.hbm [resolvable:$true] %s30
      %s32 = sshll.u32 [#allocation6], 4
      %s33 = int_to_ptr.vmem [resolvable:$true] %s32
      %38 = dma.hbm_to_vmem [thread:$0]  %s31, 2048, %s33, [#allocation7], 64, 64, 4
    $region13: #{llama_mlp.1} parent=1 // pred_fallthru
      _
    // Predicated region
    $region14: #{llama_mlp.1} parent=1 // pred_check
      _
    $region15: #{llama_mlp.1} parent=1 // pred_check_branch
      %40 = sbr.rel (0) target = $region17
    $region16: #{llama_mlp.1} parent=1 // pred_region
      %42 = dma.done [#allocation4], 4096
    $region17: #{llama_mlp.1} parent=1 // pred_fallthru
      _
    // Predicated region
    $region18: #{llama_mlp.1} parent=1 // pred_check
      _
    $region19: #{llama_mlp.1} parent=1 // pred_check_branch
      %44 = sbr.rel (0) target = $region21
    $region20: #{llama_mlp.1} parent=1 // pred_region
      %46 = dma.done [#allocation7], 2048
    $region21: #{llama_mlp.1} parent=1 // pred_fallthru
      _
    %p47 = scmp.eq.s32.totalorder 0, 0
    // Predicated region
    $region22: #{llama_mlp.1} parent=1 // pred_check
      %p48 = pneg %p47
    $region23: #{llama_mlp.1} parent=1 // pred_check_branch
      %50 = sbr.rel (%p48) target = $region25
    $region24: #{llama_mlp.1} parent=1 // pred_region
      %51 = vst [vmem:[#allocation2] sm:$0xff] 0.0
      %52 = vst [vmem:[#allocation2 + $0x8] sm:$0xff] 0.0
    $region25: #{llama_mlp.1} parent=1 // pred_fallthru
      _
    %v53 = vld [vmem:[%s0] sm:$0xf]
    %v54 = vld [vmem:[%s0 + $0x4] sm:$0xf]
    %v55 = vld [vmem:[#allocation3] sm:$0xff]
    %v56 = vld [vmem:[#allocation3 + $0x8] sm:$0xff]
    %v57 = vld [vmem:[#allocation3 + $0x10] sm:$0xff]
    %v58 = vld [vmem:[#allocation3 + $0x18] sm:$0xff]
    %v59 = vld [vmem:[#allocation3 + $0x20] sm:$0xff]
    %v60 = vld [vmem:[#allocation3 + $0x28] sm:$0xff]
    %v61 = vld [vmem:[#allocation3 + $0x30] sm:$0xff]
    %v62 = vld [vmem:[#allocation3 + $0x38] sm:$0xff]
    %v63 = vld [vmem:[#allocation3 + $0x40] sm:$0xff]
    %v64 = vld [vmem:[#allocation3 + $0x48] sm:$0xff]
    %v65 = vld [vmem:[#allocation3 + $0x50] sm:$0xff]
    %v66 = vld [vmem:[#allocation3 + $0x58] sm:$0xff]
    %v67 = vld [vmem:[#allocation3 + $0x60] sm:$0xff]
    %v68 = vld [vmem:[#allocation3 + $0x68] sm:$0xff]
    %v69 = vld [vmem:[#allocation3 + $0x70] sm:$0xff]
    %v70 = vld [vmem:[#allocation3 + $0x78] sm:$0xff]
    %v71 = vld [vmem:[#allocation3 + $0x80] sm:$0xff]
    %v72 = vld [vmem:[#allocation3 + $0x88] sm:$0xff]
    %v73 = vld [vmem:[#allocation3 + $0x90] sm:$0xff]
    %v74 = vld [vmem:[#allocation3 + $0x98] sm:$0xff]
    %v75 = vld [vmem:[#allocation3 + $0xa0] sm:$0xff]
    %v76 = vld [vmem:[#allocation3 + $0xa8] sm:$0xff]
    %v77 = vld [vmem:[#allocation3 + $0xb0] sm:$0xff]
    %v78 = vld [vmem:[#allocation3 + $0xb8] sm:$0xff]
    %v79 = vld [vmem:[#allocation3 + $0xc0] sm:$0xff]
    %v80 = vld [vmem:[#allocation3 + $0xc8] sm:$0xff]
    %v81 = vld [vmem:[#allocation3 + $0xd0] sm:$0xff]
    %v82 = vld [vmem:[#allocation3 + $0xd8] sm:$0xff]
    %v83 = vld [vmem:[#allocation3 + $0xe0] sm:$0xff]
    %v84 = vld [vmem:[#allocation3 + $0xe8] sm:$0xff]
    %v85 = vld [vmem:[#allocation3 + $0xf0] sm:$0xff]
    %v86 = vld [vmem:[#allocation3 + $0xf8] sm:$0xff]
    %v89 = vunpack.c.l.b16 %v53
    %v90 = vunpack.c.l.b16 %v54
    %v91 = vpack.c.b16 %v90, %v89
    %v125 = vunpack.c.l.b16 %v55
    %v126 = vunpack.c.h.b16 %v55
    %v127 = vunpack.c.l.b16 %v56
    %v128 = vunpack.c.h.b16 %v56
    %v129 = vunpack.c.l.b16 %v57
    %v130 = vunpack.c.h.b16 %v57
    %v131 = vunpack.c.l.b16 %v58
    %v132 = vunpack.c.h.b16 %v58
    %v133 = vunpack.c.l.b16 %v59
    %v134 = vunpack.c.h.b16 %v59
    %v135 = vunpack.c.l.b16 %v60
    %v136 = vunpack.c.h.b16 %v60
    %v137 = vunpack.c.l.b16 %v61
    %v138 = vunpack.c.h.b16 %v61
    %v139 = vunpack.c.l.b16 %v62
    %v140 = vunpack.c.h.b16 %v62
    %v141 = vunpack.c.l.b16 %v63
    %v142 = vunpack.c.h.b16 %v63
    %v143 = vunpack.c.l.b16 %v64
    %v144 = vunpack.c.h.b16 %v64
    %v145 = vunpack.c.l.b16 %v65
    %v146 = vunpack.c.h.b16 %v65
    %v147 = vunpack.c.l.b16 %v66
    %v148 = vunpack.c.h.b16 %v66
    %v149 = vunpack.c.l.b16 %v67
    %v150 = vunpack.c.h.b16 %v67
    %v151 = vunpack.c.l.b16 %v68
    %v152 = vunpack.c.h.b16 %v68
    %v153 = vunpack.c.l.b16 %v69
    %v154 = vunpack.c.h.b16 %v69
    %v155 = vunpack.c.l.b16 %v70
    %v156 = vunpack.c.h.b16 %v70
    %v157 = vunpack.c.l.b16 %v71
    %v158 = vunpack.c.h.b16 %v71
    %v159 = vunpack.c.l.b16 %v72
    %v160 = vunpack.c.h.b16 %v72
    %v161 = vunpack.c.l.b16 %v73
    %v162 = vunpack.c.h.b16 %v73
    %v163 = vunpack.c.l.b16 %v74
    %v164 = vunpack.c.h.b16 %v74
    %v165 = vunpack.c.l.b16 %v75
    %v166 = vunpack.c.h.b16 %v75
    %v167 = vunpack.c.l.b16 %v76
    %v168 = vunpack.c.h.b16 %v76
    %v169 = vunpack.c.l.b16 %v77
    %v170 = vunpack.c.h.b16 %v77
    %v171 = vunpack.c.l.b16 %v78
    %v172 = vunpack.c.h.b16 %v78
    %v173 = vunpack.c.l.b16 %v79
    %v174 = vunpack.c.h.b16 %v79
    %v175 = vunpack.c.l.b16 %v80
    %v176 = vunpack.c.h.b16 %v80
    %v177 = vunpack.c.l.b16 %v81
    %v178 = vunpack.c.h.b16 %v81
    %v179 = vunpack.c.l.b16 %v82
    %v180 = vunpack.c.h.b16 %v82
    %v181 = vunpack.c.l.b16 %v83
    %v182 = vunpack.c.h.b16 %v83
    %v183 = vunpack.c.l.b16 %v84
    %v184 = vunpack.c.h.b16 %v84
    %v185 = vunpack.c.l.b16 %v85
    %v186 = vunpack.c.h.b16 %v85
    %v187 = vunpack.c.l.b16 %v86
    %v188 = vunpack.c.h.b16 %v86
    %v189 = vpack.c.b16 %v129, %v125
    %v190 = vpack.c.b16 %v130, %v126
    %v191 = vpack.c.b16 %v131, %v127
    %v192 = vpack.c.b16 %v132, %v128
    %v193 = vpack.c.b16 %v137, %v133
    %v194 = vpack.c.b16 %v138, %v134
    %v195 = vpack.c.b16 %v139, %v135
    %v196 = vpack.c.b16 %v140, %v136
    %v197 = vpack.c.b16 %v145, %v141
    %v198 = vpack.c.b16 %v146, %v142
    %v199 = vpack.c.b16 %v147, %v143
    %v200 = vpack.c.b16 %v148, %v144
    %v201 = vpack.c.b16 %v153, %v149
    %v202 = vpack.c.b16 %v154, %v150
    %v203 = vpack.c.b16 %v155, %v151
    %v204 = vpack.c.b16 %v156, %v152
    %v205 = vpack.c.b16 %v161, %v157
    %v206 = vpack.c.b16 %v162, %v158
    %v207 = vpack.c.b16 %v163, %v159
    %v208 = vpack.c.b16 %v164, %v160
    %v209 = vpack.c.b16 %v169, %v165
    %v210 = vpack.c.b16 %v170, %v166
    %v211 = vpack.c.b16 %v171, %v167
    %v212 = vpack.c.b16 %v172, %v168
    %v213 = vpack.c.b16 %v177, %v173
    %v214 = vpack.c.b16 %v178, %v174
    %v215 = vpack.c.b16 %v179, %v175
    %v216 = vpack.c.b16 %v180, %v176
    %v217 = vpack.c.b16 %v185, %v181
    %v218 = vpack.c.b16 %v186, %v182
    %v219 = vpack.c.b16 %v187, %v183
    %v220 = vpack.c.b16 %v188, %v184
    %253 = vmatpush.bf16.msra.mxu0 %v217
    %254 = vmatpush.bf16.msra.mxu0 %v213
    %255 = vmatpush.bf16.msra.mxu0 %v209
    %256 = vmatpush.bf16.msra.mxu0 %v205
    %257 = vmatpush.bf16.msra.mxu0 %v201
    %258 = vmatpush.bf16.msra.mxu0 %v197
    %259 = vmatpush.bf16.msra.mxu0 %v193
    %260 = vmatpush.bf16.msra.mxu0 %v189
    %261 = vmatmul.bf16.gmra.mxu0 %v91
    %v262 = vpop.f32.mrf.mxu0
    %v263 = vadd.f32 0.0, %v262
    %v264 = vpop.f32.mrf.mxu0
    %v265 = vadd.f32 0.0, %v264
    %266 = vdwg.mxu0
    %267 = vmatpush.bf16.msra.mxu0 %v218
    %268 = vmatpush.bf16.msra.mxu0 %v214
    %269 = vmatpush.bf16.msra.mxu0 %v210
    %270 = vmatpush.bf16.msra.mxu0 %v206
    %271 = vmatpush.bf16.msra.mxu0 %v202
    %272 = vmatpush.bf16.msra.mxu0 %v198
    %273 = vmatpush.bf16.msra.mxu0 %v194
    %274 = vmatpush.bf16.msra.mxu0 %v190
    %275 = vmatmul.bf16.gmra.mxu0 %v91
    %v276 = vpop.f32.mrf.mxu0
    %v277 = vadd.f32 0.0, %v276
    %v278 = vpop.f32.mrf.mxu0
    %v279 = vadd.f32 0.0, %v278
    %280 = vdwg.mxu0
    %281 = vmatpush.bf16.msra.mxu0 %v219
    %282 = vmatpush.bf16.msra.mxu0 %v215
    %283 = vmatpush.bf16.msra.mxu0 %v211
    %284 = vmatpush.bf16.msra.mxu0 %v207
    %285 = vmatpush.bf16.msra.mxu0 %v203
    %286 = vmatpush.bf16.msra.mxu0 %v199
    %287 = vmatpush.bf16.msra.mxu0 %v195
    %288 = vmatpush.bf16.msra.mxu0 %v191
    %289 = vmatmul.bf16.gmra.mxu0 %v91
    %v290 = vpop.f32.mrf.mxu0
    %v291 = vadd.f32 0.0, %v290
    %v292 = vpop.f32.mrf.mxu0
    %v293 = vadd.f32 0.0, %v292
    %294 = vdwg.mxu0
    %295 = vmatpush.bf16.msra.mxu0 %v220
    %296 = vmatpush.bf16.msra.mxu0 %v216
    %297 = vmatpush.bf16.msra.mxu0 %v212
    %298 = vmatpush.bf16.msra.mxu0 %v208
    %299 = vmatpush.bf16.msra.mxu0 %v204
    %300 = vmatpush.bf16.msra.mxu0 %v200
    %301 = vmatpush.bf16.msra.mxu0 %v196
    %302 = vmatpush.bf16.msra.mxu0 %v192
    %303 = vmatmul.bf16.gmra.mxu0 %v91
    %v304 = vpop.f32.mrf.mxu0
    %v305 = vadd.f32 0.0, %v304
    %v306 = vpop.f32.mrf.mxu0
    %v307 = vadd.f32 0.0, %v306
    %308 = vdwg.mxu0
    %v309 = vxor.u32 %v263, 2147483648
    %v310 = vxor.u32 %v277, 2147483648
    %v311 = vxor.u32 %v265, 2147483648
    %v312 = vxor.u32 %v279, 2147483648
    %v313 = vmul.f32 %v309, 1.442695
    %v314 = vpow.pop %v313
    %v315 = vmul.f32 %v310, 1.442695
    %v316 = vpow.pop %v315
    %v317 = vmul.f32 %v311, 1.442695
    %v318 = vpow.pop %v317
    %v319 = vmul.f32 %v312, 1.442695
    %v320 = vpow.pop %v319
    %v321 = vadd.f32 %v314, 1.0
    %v322 = vadd.f32 %v316, 1.0
    %v323 = vadd.f32 %v318, 1.0
    %v324 = vadd.f32 %v320, 1.0
    %v325 = vrcp.pop %v321
    %v326 = vmul.f32 %v321, %v325
    %v327 = vsub.f32 1.0, %v326
    %v328 = vmul.f32 %v325, %v327
    %v329 = vadd.f32 %v325, %v328
    %vm330 = vweird.f32 %v321
    %vm331 = vweird.f32 %v325
    %vm332 = vmor %vm330, %vm331
    %v333 = vsel %vm332, %v325, %v329
    %v334 = vand.u32 2147483647, %v321
    %vm335 = vcmp.eq.f32.partialorder %v334, 8.507059e+37
    %v336 = vand.u32 %v321, 2147483648
    %v337 = vor.u32 1.1754944e-38, %v336
    %v338 = vsel %vm335, %v337, %v333
    %v339 = vmul.f32 1.0, %v338
    %v340 = vrcp.pop %v322
    %v341 = vmul.f32 %v322, %v340
    %v342 = vsub.f32 1.0, %v341
    %v343 = vmul.f32 %v340, %v342
    %v344 = vadd.f32 %v340, %v343
    %vm345 = vweird.f32 %v322
    %vm346 = vweird.f32 %v340
    %vm347 = vmor %vm345, %vm346
    %v348 = vsel %vm347, %v340, %v344
    %v349 = vand.u32 2147483647, %v322
    %vm350 = vcmp.eq.f32.partialorder %v349, 8.507059e+37
    %v351 = vand.u32 %v322, 2147483648
    %v352 = vor.u32 1.1754944e-38, %v351
    %v353 = vsel %vm350, %v352, %v348
    %v354 = vmul.f32 1.0, %v353
    %v355 = vrcp.pop %v323
    %v356 = vmul.f32 %v323, %v355
    %v357 = vsub.f32 1.0, %v356
    %v358 = vmul.f32 %v355, %v357
    %v359 = vadd.f32 %v355, %v358
    %vm360 = vweird.f32 %v323
    %vm361 = vweird.f32 %v355
    %vm362 = vmor %vm360, %vm361
    %v363 = vsel %vm362, %v355, %v359
    %v364 = vand.u32 2147483647, %v323
    %vm365 = vcmp.eq.f32.partialorder %v364, 8.507059e+37
    %v366 = vand.u32 %v323, 2147483648
    %v367 = vor.u32 1.1754944e-38, %v366
    %v368 = vsel %vm365, %v367, %v363
    %v369 = vmul.f32 1.0, %v368
    %v370 = vrcp.pop %v324
    %v371 = vmul.f32 %v324, %v370
    %v372 = vsub.f32 1.0, %v371
    %v373 = vmul.f32 %v370, %v372
    %v374 = vadd.f32 %v370, %v373
    %vm375 = vweird.f32 %v324
    %vm376 = vweird.f32 %v370
    %vm377 = vmor %vm375, %vm376
    %v378 = vsel %vm377, %v370, %v374
    %v379 = vand.u32 2147483647, %v324
    %vm380 = vcmp.eq.f32.partialorder %v379, 8.507059e+37
    %v381 = vand.u32 %v324, 2147483648
    %v382 = vor.u32 1.1754944e-38, %v381
    %v383 = vsel %vm380, %v382, %v378
    %v384 = vmul.f32 1.0, %v383
    %v385 = vmul.f32 %v263, %v339
    %v386 = vmul.f32 %v277, %v354
    %v387 = vmul.f32 %v265, %v369
    %v388 = vmul.f32 %v279, %v384
    %v389 = vmul.f32 %v385, %v291
    %v390 = vmul.f32 %v386, %v305
    %v391 = vmul.f32 %v387, %v293
    %v392 = vmul.f32 %v388, %v307
    %v393 = vld [vmem:[#allocation2] sm:$0xff]
    %v394 = vld [vmem:[#allocation2 + $0x8] sm:$0xff]
    %v395 = vpack.c.bf16 %v391, %v389
    %v396 = vpack.c.bf16 %v392, %v390
    %v397 = vld [vmem:[#allocation6] sm:$0xf]
    %v398 = vld [vmem:[#allocation6 + $0x4] sm:$0xf]
    %v399 = vld [vmem:[#allocation6 + $0x8] sm:$0xf]
    %v400 = vld [vmem:[#allocation6 + $0xc] sm:$0xf]
    %v401 = vld [vmem:[#allocation6 + $0x10] sm:$0xf]
    %v402 = vld [vmem:[#allocation6 + $0x14] sm:$0xf]
    %v403 = vld [vmem:[#allocation6 + $0x18] sm:$0xf]
    %v404 = vld [vmem:[#allocation6 + $0x1c] sm:$0xf]
    %v405 = vld [vmem:[#allocation6 + $0x20] sm:$0xf]
    %v406 = vld [vmem:[#allocation6 + $0x24] sm:$0xf]
    %v407 = vld [vmem:[#allocation6 + $0x28] sm:$0xf]
    %v408 = vld [vmem:[#allocation6 + $0x2c] sm:$0xf]
    %v409 = vld [vmem:[#allocation6 + $0x30] sm:$0xf]
    %v410 = vld [vmem:[#allocation6 + $0x34] sm:$0xf]
    %v411 = vld [vmem:[#allocation6 + $0x38] sm:$0xf]
    %v412 = vld [vmem:[#allocation6 + $0x3c] sm:$0xf]
    %v413 = vld [vmem:[#allocation6 + $0x40] sm:$0xf]
    %v414 = vld [vmem:[#allocation6 + $0x44] sm:$0xf]
    %v415 = vld [vmem:[#allocation6 + $0x48] sm:$0xf]
    %v416 = vld [vmem:[#allocation6 + $0x4c] sm:$0xf]
    %v417 = vld [vmem:[#allocation6 + $0x50] sm:$0xf]
    %v418 = vld [vmem:[#allocation6 + $0x54] sm:$0xf]
    %v419 = vld [vmem:[#allocation6 + $0x58] sm:$0xf]
    %v420 = vld [vmem:[#allocation6 + $0x5c] sm:$0xf]
    %v421 = vld [vmem:[#allocation6 + $0x60] sm:$0xf]
    %v422 = vld [vmem:[#allocation6 + $0x64] sm:$0xf]
    %v423 = vld [vmem:[#allocation6 + $0x68] sm:$0xf]
    %v424 = vld [vmem:[#allocation6 + $0x6c] sm:$0xf]
    %v425 = vld [vmem:[#allocation6 + $0x70] sm:$0xf]
    %v426 = vld [vmem:[#allocation6 + $0x74] sm:$0xf]
    %v427 = vld [vmem:[#allocation6 + $0x78] sm:$0xf]
    %v428 = vld [vmem:[#allocation6 + $0x7c] sm:$0xf]
    %v461 = vunpack.c.l.b16 %v397
    %v462 = vunpack.c.l.b16 %v398
    %v463 = vunpack.c.l.b16 %v399
    %v464 = vunpack.c.l.b16 %v400
    %v465 = vunpack.c.l.b16 %v401
    %v466 = vunpack.c.l.b16 %v402
    %v467 = vunpack.c.l.b16 %v403
    %v468 = vunpack.c.l.b16 %v404
    %v469 = vunpack.c.l.b16 %v405
    %v470 = vunpack.c.l.b16 %v406
    %v471 = vunpack.c.l.b16 %v407
    %v472 = vunpack.c.l.b16 %v408
    %v473 = vunpack.c.l.b16 %v409
    %v474 = vunpack.c.l.b16 %v410
    %v475 = vunpack.c.l.b16 %v411
    %v476 = vunpack.c.l.b16 %v412
    %v477 = vunpack.c.l.b16 %v413
    %v478 = vunpack.c.l.b16 %v414
    %v479 = vunpack.c.l.b16 %v415
    %v480 = vunpack.c.l.b16 %v416
    %v481 = vunpack.c.l.b16 %v417
    %v482 = vunpack.c.l.b16 %v418
    %v483 = vunpack.c.l.b16 %v419
    %v484 = vunpack.c.l.b16 %v420
    %v485 = vunpack.c.l.b16 %v421
    %v486 = vunpack.c.l.b16 %v422
    %v487 = vunpack.c.l.b16 %v423
    %v488 = vunpack.c.l.b16 %v424
    %v489 = vunpack.c.l.b16 %v425
    %v490 = vunpack.c.l.b16 %v426
    %v491 = vunpack.c.l.b16 %v427
    %v492 = vunpack.c.l.b16 %v428
    %v493 = vpack.c.b16 %v462, %v461
    %v494 = vpack.c.b16 %v464, %v463
    %v495 = vpack.c.b16 %v466, %v465
    %v496 = vpack.c.b16 %v468, %v467
    %v497 = vpack.c.b16 %v470, %v469
    %v498 = vpack.c.b16 %v472, %v471
    %v499 = vpack.c.b16 %v474, %v473
    %v500 = vpack.c.b16 %v476, %v475
    %v501 = vpack.c.b16 %v478, %v477
    %v502 = vpack.c.b16 %v480, %v479
    %v503 = vpack.c.b16 %v482, %v481
    %v504 = vpack.c.b16 %v484, %v483
    %v505 = vpack.c.b16 %v486, %v485
    %v506 = vpack.c.b16 %v488, %v487
    %v507 = vpack.c.b16 %v490, %v489
    %v508 = vpack.c.b16 %v492, %v491
    %525 = vmatpush.bf16.msra.mxu0 %v500
    %526 = vmatpush.bf16.msra.mxu0 %v499
    %527 = vmatpush.bf16.msra.mxu0 %v498
    %528 = vmatpush.bf16.msra.mxu0 %v497
    %529 = vmatpush.bf16.msra.mxu0 %v496
    %530 = vmatpush.bf16.msra.mxu0 %v495
    %531 = vmatpush.bf16.msra.mxu0 %v494
    %532 = vmatpush.bf16.msra.mxu0 %v493
    %533 = vmatmul.bf16.gmra.mxu0 %v395
    %v534 = vpop.f32.mrf.mxu0
    %v535 = vadd.f32 0.0, %v534
    %v536 = vpop.f32.mrf.mxu0
    %v537 = vadd.f32 0.0, %v536
    %538 = vdwg.mxu0
    %539 = vmatpush.bf16.msra.mxu0 %v508
    %540 = vmatpush.bf16.msra.mxu0 %v507
    %541 = vmatpush.bf16.msra.mxu0 %v506
    %542 = vmatpush.bf16.msra.mxu0 %v505
    %543 = vmatpush.bf16.msra.mxu0 %v504
    %544 = vmatpush.bf16.msra.mxu0 %v503
    %545 = vmatpush.bf16.msra.mxu0 %v502
    %546 = vmatpush.bf16.msra.mxu0 %v501
    %547 = vmatmul.bf16.gmra.mxu0 %v396
    %v548 = vpop.f32.mrf.mxu0
    %v549 = vadd.f32 %v535, %v548
    %v550 = vpop.f32.mrf.mxu0
    %v551 = vadd.f32 %v537, %v550
    %552 = vdwg.mxu0
    %v553 = vadd.f32 %v393, %v549
    %v554 = vadd.f32 %v394, %v551
    %555 = vst [vmem:[#allocation2] sm:$0xff] %v553
    %556 = vst [vmem:[#allocation2 + $0x8] sm:$0xff] %v554
    // Predicated region
    $region26: #{llama_mlp.1} parent=1 // pred_check
      %p557 = pneg %p47
    $region27: #{llama_mlp.1} parent=1 // pred_check_branch
      %559 = sbr.rel (%p557) target = $region29
    $region28: #{llama_mlp.1} parent=1 // pred_region
      %v560 = vld [vmem:[#allocation2] sm:$0xff]
      %v561 = vld [vmem:[#allocation2 + $0x8] sm:$0xff]
      %562 = vst [vmem:[#allocation8] sm:$0xff] %v560
      %563 = vst [vmem:[#allocation8 + $0x8] sm:$0xff] %v561
    $region29: #{llama_mlp.1} parent=1 // pred_fallthru
      _
    // Predicated region
    $region30: #{llama_mlp.1} parent=1 // pred_check
      _
    $region31: #{llama_mlp.1} parent=1 // pred_check_branch
      %565 = sbr.rel (0) target = $region33
    $region32: #{llama_mlp.1} parent=1 // pred_region
      %567 = vsyncadd [#allocation5], 0
      %s568 = sshll.u32 [#allocation8], 4
      %s569 = int_to_ptr.vmem [resolvable:$true] %s568
      %s570 = sshll.u32 %s3, 4
      %s571 = int_to_ptr.hbm [resolvable:$true] %s570
      %576 = dma.vmem_to_hbm [thread:$0]  %s569, 256, %s571, [#allocation5], 128, 128, 8
    $region33: #{llama_mlp.1} parent=1 // pred_fallthru
      _
    // Predicated region
    $region34: #{llama_mlp.1} parent=1 // pred_check
      _
    $region35: #{llama_mlp.1} parent=1 // pred_check_branch
      %578 = sbr.rel (0) target = $region37
    $region36: #{llama_mlp.1} parent=1 // pred_region
      %580 = dma.done [#allocation5], 256
    $region37: #{llama_mlp.1} parent=1 // pred_fallthru
      _
    %581 = vsyncpa [#allocation4], 1
    %582 = vsyncpa [#allocation7], 1
    %583 = vsyncpa [#allocation5], 1

</llo_original>
